<compile_context>
chip_gen: v7x
topology: tpu7x:2x2x1
jax: 0.10.0
libtpu: 0.0.40
codegen_flags: <defaults>
</compile_context>

<pallas_src>
import functools

import jax
import jax.numpy as jnp
from jax.experimental import pallas as pl
from jax.experimental.pallas import tpu as pltpu


def _round_up(x, m):
    return ((x + m - 1) // m) * m


def _cdiv(a, b):
    return (a + b - 1) // b


# ----------------------------------------------------------------------------
# Kernel: one (batch-tile, class-tile) output block, reduced over hidden (k).
# The out BlockSpec index is independent of k, so o_ref is VMEM-resident over
# the reduction; init it with the bias at k==0, accumulate MXU partials in f32.
# ----------------------------------------------------------------------------
def _classifier_kernel(x_ref, w_ref, b_ref, o_ref):
    k = pl.program_id(2)

    @pl.when(k == 0)
    def _():
        o_ref[...] = jnp.broadcast_to(b_ref[...], o_ref.shape)

    o_ref[...] += jnp.dot(x_ref[...], w_ref[...],
                          preferred_element_type=jnp.float32)


def prepare_classifier_params(weight, bias, *, compute_dtype=jnp.bfloat16,
                              lane_multiple=256):
    """One-time (model-load time) parameter prep for ServerModel's classifier.

    weight: (C, H) float32 -- PyTorch nn.Linear layout.   bias: (C,) float32.
    Returns (w_pad, b_pad, num_classes):
      w_pad: (Hpad, Cpad) = weight.T cast to compute_dtype, zero-padded so
             Cpad % lane_multiple == 0 and Hpad % 128 == 0.
      b_pad: (1, Cpad) float32 (used to initialise the f32 output block).
    """
    C, H = weight.shape
    Cpad = _round_up(C, lane_multiple)
    Hpad = _round_up(H, 128)
    w_pad = (jnp.zeros((Hpad, Cpad), dtype=compute_dtype)
             .at[:H, :C].set(weight.T.astype(compute_dtype)))
    b_pad = jnp.zeros((1, Cpad), dtype=jnp.float32).at[0, :C].set(
        bias.astype(jnp.float32))
    return w_pad, b_pad, C


def _choose_tiles(B, Hpad, Cpad, *, x_bytes, w_bytes, o_bytes,
                  tm_max, vmem_budget_bytes):
    """Static (trace-time) tile selection under an explicit VMEM budget."""
    gran = 16 if x_bytes < 4 else 8   # bf16 needs second-minor multiples of 16

    # Batch tiling: bound padding waste, and give the "parallel" batch axis at
    # least 2 steps (v7x has 2 TensorCores) once each tile has >= gran rows.
    min_m = 2 if B >= 2 * gran else 1
    num_m = max(min_m, _cdiv(B, tm_max))
    TM = _round_up(_cdiv(B, num_m), gran)

    def fits(tk, tn):
        vmem = (2 * TM * tk * x_bytes       # x tiles, double-buffered
                + 2 * tk * tn * w_bytes     # weight block
                + 2 * tn * 4                # bias block
                + 2 * TM * tn * o_bytes     # resident f32 output block
                + (1 << 20))                # slack for compiler scratch
        return vmem <= vmem_budget_bytes

    tn_cands = [t for t in range(Cpad, 0, -256) if Cpad % t == 0] or [Cpad]
    tk_cands = [t for t in range(Hpad, 0, -128) if Hpad % t == 0] or [Hpad]

    # 1) Whole weight as a single VMEM-resident block (common small-head case:
    #    constant W index_map -> fetched from HBM exactly once).
    if fits(Hpad, Cpad):
        return TM, Hpad, Cpad
    # 2) Single K block, tile classes (bounds VMEM independent of num_classes).
    for tn in tn_cands:
        if fits(Hpad, tn):
            return TM, Hpad, tn
    # 3) Tile both K and N (very large hidden x very large class head).
    for tk in tk_cands:
        for tn in tn_cands:
            if fits(tk, tn):
                return TM, tk, tn
    # 4) Smallest legal tiles (always fits any realistic budget).
    return TM, tk_cands[-1], tn_cands[-1]


@functools.partial(jax.jit,
                   static_argnames=("num_classes", "tm_max", "vmem_budget_bytes"))
def server_model_forward(x, w_pad, b_pad, *, num_classes,
                         tm_max=512, vmem_budget_bytes=32 * 1024 * 1024):
    """Pallas implementation of ServerModel.forward: classifier(x) = x @ W.T + b.

    x:     (B, H)        edge features (any float dtype; cast to w_pad.dtype)
    w_pad: (Hpad, Cpad)  pre-transposed/padded/cast weight (prepare_classifier_params)
    b_pad: (1, Cpad)     padded f32 bias
    returns (B, num_classes) float32
    """
    B, H = x.shape
    Hpad, Cpad = w_pad.shape

    compute_dtype = w_pad.dtype
    x = x.astype(compute_dtype)          # no-op / fused if already bf16
    x_bytes = jnp.dtype(compute_dtype).itemsize
    w_bytes = x_bytes
    o_bytes = 4

    TM, TK, TN = _choose_tiles(B, Hpad, Cpad,
                               x_bytes=x_bytes, w_bytes=w_bytes, o_bytes=o_bytes,
                               tm_max=tm_max, vmem_budget_bytes=vmem_budget_bytes)
    num_m = _cdiv(B, TM)
    Bpad = num_m * TM
    num_n = Cpad // TN
    num_k = Hpad // TK

    # Pad only when required; the common serving case (B % TM == 0, H % 128 == 0)
    # skips this extra HBM pass over the activations entirely.
    if (Bpad, Hpad) != (B, H):
        x = jnp.pad(x, ((0, Bpad - B), (0, Hpad - H)))

    # Weight traffic: fetched once when fully resident, else re-streamed per
    # batch tile (W block index does not depend on the batch grid axis).
    w_streams = 1 if (num_k == 1 and num_n == 1) else num_m
    cost = pl.CostEstimate(
        flops=2 * Bpad * Hpad * Cpad,
        transcendentals=0,
        bytes_accessed=(Bpad * Hpad * x_bytes
                        + w_streams * Hpad * Cpad * w_bytes
                        + Cpad * 4
                        + Bpad * Cpad * o_bytes),
    )

    out = pl.pallas_call(
        _classifier_kernel,
        out_shape=jax.ShapeDtypeStruct((Bpad, Cpad), jnp.float32),
        grid=(num_m, num_n, num_k),
        in_specs=[
            pl.BlockSpec((TM, TK), lambda i, j, k: (i, k)),   # activations stream
            pl.BlockSpec((TK, TN), lambda i, j, k: (k, j)),   # weight (resident if 1x1)
            pl.BlockSpec((1, TN), lambda i, j, k: (0, j)),    # bias
        ],
        out_specs=pl.BlockSpec((TM, TN), lambda i, j, k: (i, j)),
        compiler_params=pltpu.CompilerParams(
            dimension_semantics=("parallel", "parallel", "arbitrary"),
            vmem_limit_bytes=vmem_budget_bytes,
        ),
        cost_estimate=cost,
    )(x, w_pad, b_pad)

    return out[:B, :num_classes]


if __name__ == "__main__":
    # Small shapes consistent with a classifier head on edge features.
    B, H, C = 8, 128, 16

    key = jax.random.PRNGKey(0)
    kx, kw, kb = jax.random.split(key, 3)

    x = jax.random.normal(kx, (B, H), dtype=jnp.float32)
    # Deterministic synthetic classifier parameters (PyTorch layout: (C, H)).
    weight = jax.random.normal(kw, (C, H), dtype=jnp.float32) * 0.05
    bias = jax.random.normal(kb, (C,), dtype=jnp.float32) * 0.01

    # One-time parameter preparation (equivalent to model-load time).
    w_pad, b_pad, num_classes = prepare_classifier_params(weight, bias)

    out = server_model_forward(x, w_pad, b_pad, num_classes=num_classes)
    out = jax.block_until_ready(out)

    # Reference check against plain JAX (same semantics as nn.Linear).
    # bf16 operands with f32 accumulation -> bf16-level tolerance.
    ref = x @ weight.T + bias
    assert out.shape == (B, C)
    assert jnp.allclose(out, ref, atol=2e-2, rtol=2e-2), \
        float(jnp.max(jnp.abs(out - ref)))

    print("KERNEL_OK")
</pallas_src>

<mosaic_0001>
module attributes {stable_mosaic.version = 11 : i64} {
  func.func @_classifier_kernel(%arg0: i32, %arg1: i32, %arg2: i32, %arg3: memref<16x128xbf16, #tpu.memory_space<vmem>>, %arg4: memref<128x256xbf16, #tpu.memory_space<vmem>>, %arg5: memref<1x256xf32, #tpu.memory_space<vmem>>, %arg6: memref<16x256xf32, #tpu.memory_space<vmem>>) attributes {dimension_semantics = [#tpu.dimension_semantics<parallel>, #tpu.dimension_semantics<parallel>, #tpu.dimension_semantics<arbitrary>], iteration_bounds = array<i64: 1, 1, 1>, scalar_prefetch = 0 : i64, scratch_operands = 0 : i64, tpu.core_type = #tpu.core_type<tc>, window_params = [{transform_indices = @transform_0, window_bounds = array<i64: 16, 128>}, {transform_indices = @transform_1, window_bounds = array<i64: 128, 256>}, {transform_indices = @transform_2, window_bounds = array<i64: 1, 256>}, {transform_indices = @transform_3, window_bounds = array<i64: 16, 256>}]} {
    %c0_i32 = arith.constant 0 : i32
    %0 = arith.cmpi eq, %arg2, %c0_i32 : i32
    %1 = arith.extui %0 : i1 to i32
    %c0_i32_0 = arith.constant 0 : i32
    %2 = arith.cmpi ne, %1, %c0_i32_0 : i32
    scf.if %2 {
      %c0_8 = arith.constant 0 : index
      %c0_9 = arith.constant 0 : index
      %9 = vector.load %arg5[%c0_8, %c0_9] : memref<1x256xf32, #tpu.memory_space<vmem>>, vector<1x256xf32>
      %10 = vector.shape_cast %9 : vector<1x256xf32> to vector<1x256xf32>
      %11 = vector.broadcast %10 : vector<1x256xf32> to vector<16x256xf32>
      %c0_10 = arith.constant 0 : index
      %c0_11 = arith.constant 0 : index
      %12 = vector.load %arg6[%c0_10, %c0_11] : memref<16x256xf32, #tpu.memory_space<vmem>>, vector<16x256xf32>
      tpu.vector_store %arg6[%c0_10, %c0_11], %11 {strides = array<i32>} : memref<16x256xf32, #tpu.memory_space<vmem>>, vector<16x256xf32>,
    } else {
    }
    %c0 = arith.constant 0 : index
    %c0_1 = arith.constant 0 : index
    %3 = vector.load %arg6[%c0, %c0_1] : memref<16x256xf32, #tpu.memory_space<vmem>>, vector<16x256xf32>
    %c0_2 = arith.constant 0 : index
    %c0_3 = arith.constant 0 : index
    %4 = vector.load %arg3[%c0_2, %c0_3] : memref<16x128xbf16, #tpu.memory_space<vmem>>, vector<16x128xbf16>
    %c0_4 = arith.constant 0 : index
    %c0_5 = arith.constant 0 : index
    %5 = vector.load %arg4[%c0_4, %c0_5] : memref<128x256xbf16, #tpu.memory_space<vmem>>, vector<128x256xbf16>
    %cst = arith.constant dense<0.000000e+00> : vector<16x256xf32>
    %6 = tpu.matmul %4, %5, %cst {dimension_numbers = #tpu.dot_dimension_numbers<[1], [0], [0], [1], [0, 0, 1, 1], [], []>} : vector<16x128xbf16>, vector<128x256xbf16>, vector<16x256xf32> -> vector<16x256xf32>
    %7 = arith.addf %3, %6 : vector<16x256xf32>
    %c0_6 = arith.constant 0 : index
    %c0_7 = arith.constant 0 : index
    %8 = vector.load %arg6[%c0_6, %c0_7] : memref<16x256xf32, #tpu.memory_space<vmem>>, vector<16x256xf32>
    tpu.vector_store %arg6[%c0_6, %c0_7], %7 {strides = array<i32>} : memref<16x256xf32, #tpu.memory_space<vmem>>, vector<16x256xf32>,
    return
  }
  func.func @transform_0(%arg0: i32, %arg1: i32, %arg2: i32) -> (i32, i32) {
    %c0_i32 = arith.constant 0 : i32
    return %arg0, %arg2 : i32, i32
  }
  func.func @transform_1(%arg0: i32, %arg1: i32, %arg2: i32) -> (i32, i32) {
    %c0_i32 = arith.constant 0 : i32
    return %arg2, %arg1 : i32, i32
  }
  func.func @transform_2(%arg0: i32, %arg1: i32, %arg2: i32) -> (i32, i32) {
    %c0_i32 = arith.constant 0 : i32
    %c0_i32_0 = arith.constant 0 : i32
    return %c0_i32, %arg1 : i32, i32
  }
  func.func @transform_3(%arg0: i32, %arg1: i32, %arg2: i32) -> (i32, i32) {
    %c0_i32 = arith.constant 0 : i32
    return %arg0, %arg1 : i32, i32
  }
}

</mosaic_0001>

<llo_original>
// kernel: server_model_forward.1
$region0: #{server_model_forward.1}
  #allocation0 [shape = 'u32[]', space=smem, size = 0x4, offset = 0x4, fixed_abs, tag = 'smem constant byte address 0x4 - core index']
  #allocation1 [shape = 'u32[144,128]{1,0:T(1,128)}', space=vmem, size = 0x12000, scoped, tag = 'internal scratch']
  %s0 = inlined_call_operand.vmem [shape: bf16[16,128], index: 0, kind: input, shape index: {}]
  %s1 = inlined_call_operand.hbm [shape: bf16[128,256], index: 1, kind: input, shape index: {}]
  %s2 = inlined_call_operand.vmem [shape: f32[1,256], index: 2, kind: input, shape index: {}]
  %s3 = inlined_call_operand.vmem [shape: f32[16,256], index: 3, kind: output, shape index: {}]
  %s4 = sld [smem:[#allocation0]]
  $region30: #{server_model_forward.1} parent=0
    _
  %s6 = ssub.s32 1, %s4
  %s7 = scalar_select 0, %s6, %s4
  $region1: #{server_model_forward.1} parent=0
    #allocation2 [shape = 'u8[65536]{0}', space=vmem, size = 0x10000, scoped, tag = 'input window, operand 1, single buffered']
    #allocation3 [shape = 's32[1]{0}', space=sflag, size = 0x4, scoped, tag = 'scoped memory for server_model_forward.1']
    %8 = vsyncpa [#allocation3], 0
    // Predicated region
    $region2: #{server_model_forward.1} parent=1 // pred_check
      _
    $region3: #{server_model_forward.1} parent=1 // pred_check_branch
      %10 = sbr.rel (0) target = $region5
    $region4: #{server_model_forward.1} parent=1 // pred_region
      _
    $region5: #{server_model_forward.1} parent=1 // pred_fallthru
      _
    // Predicated region
    $region6: #{server_model_forward.1} parent=1 // pred_check
      _
    $region7: #{server_model_forward.1} parent=1 // pred_check_branch
      %12 = sbr.rel (0) target = $region9
    $region8: #{server_model_forward.1} parent=1 // pred_region
      %s14 = ssub.s32 2048, 2048
      %15 = vsyncadd [#allocation3], %s14
      %s16 = sshll.u32 [#allocation2], 4
      %s17 = int_to_ptr.vmem [resolvable:$true] %s16
      %22 = dma.hbm_to_vmem [thread:$0]  %s1, 2048, %s17, [#allocation3], 128, 128, 8
    $region9: #{server_model_forward.1} parent=1 // pred_fallthru
      _
    // Predicated region
    $region10: #{server_model_forward.1} parent=1 // pred_check
      _
    $region11: #{server_model_forward.1} parent=1 // pred_check_branch
      %24 = sbr.rel (0) target = $region13
    $region12: #{server_model_forward.1} parent=1 // pred_region
      _
    $region13: #{server_model_forward.1} parent=1 // pred_fallthru
      _
    // Predicated region
    $region14: #{server_model_forward.1} parent=1 // pred_check
      _
    $region15: #{server_model_forward.1} parent=1 // pred_check_branch
      %26 = sbr.rel (0) target = $region17
    $region16: #{server_model_forward.1} parent=1 // pred_region
      %27 = dma.done [#allocation3], 2048
    $region17: #{server_model_forward.1} parent=1 // pred_fallthru
      _
    %p29 = scmp.eq.s32.totalorder 0, 0
    // Predicated region
    $region18: #{server_model_forward.1} parent=1 // pred_check
      %p30 = pneg %p29
    $region19: #{server_model_forward.1} parent=1 // pred_check_branch
      %32 = sbr.rel (%p30) target = $region21
    $region20: #{server_model_forward.1} parent=1 // pred_region
      %v33 = vld [vmem:[%s2] sm:$0x3]
      %v35 = vlaneseq
      %v36 = vshrl.u32 %v35, 7
      %v37 = vsub.s32 0, %v36
      %v38 = vrot.slane %v33, %v37
      %v39 = vlaneseq
      %v40 = vshrl.u32 %v39, 7
      %v41 = vsub.s32 1, %v40
      %v42 = vrot.slane %v33, %v41
      %45 = vst [vmem:[%s3] sm:$0xff] %v38
      %46 = vst [vmem:[%s3 + $0x8] sm:$0xff] %v42
      %47 = vst [vmem:[%s3 + $0x10] sm:$0xff] %v38
      %48 = vst [vmem:[%s3 + $0x18] sm:$0xff] %v42
    $region21: #{server_model_forward.1} parent=1 // pred_fallthru
      _
    %v49 = vld [vmem:[%s3] sm:$0xff]
    %v50 = vld [vmem:[%s3 + $0x8] sm:$0xff]
    %v51 = vld [vmem:[%s3 + $0x10] sm:$0xff]
    %v52 = vld [vmem:[%s3 + $0x18] sm:$0xff]
    %v53 = vld [vmem:[%s0] sm:$0xf]
    %v54 = vld [vmem:[%s0 + $0x4] sm:$0xf]
    %v55 = vld [vmem:[#allocation2] sm:$0xff]
    %v56 = vld [vmem:[#allocation2 + $0x8] sm:$0xff]
    %v57 = vld [vmem:[#allocation2 + $0x10] sm:$0xff]
    %v58 = vld [vmem:[#allocation2 + $0x18] sm:$0xff]
    %v59 = vld [vmem:[#allocation2 + $0x20] sm:$0xff]
    %v60 = vld [vmem:[#allocation2 + $0x28] sm:$0xff]
    %v61 = vld [vmem:[#allocation2 + $0x30] sm:$0xff]
    %v62 = vld [vmem:[#allocation2 + $0x38] sm:$0xff]
    %v63 = vld [vmem:[#allocation2 + $0x40] sm:$0xff]
    %v64 = vld [vmem:[#allocation2 + $0x48] sm:$0xff]
    %v65 = vld [vmem:[#allocation2 + $0x50] sm:$0xff]
    %v66 = vld [vmem:[#allocation2 + $0x58] sm:$0xff]
    %v67 = vld [vmem:[#allocation2 + $0x60] sm:$0xff]
    %v68 = vld [vmem:[#allocation2 + $0x68] sm:$0xff]
    %v69 = vld [vmem:[#allocation2 + $0x70] sm:$0xff]
    %v70 = vld [vmem:[#allocation2 + $0x78] sm:$0xff]
    %v73 = vunpack.c.l.b16 %v53
    %v74 = vunpack.c.l.b16 %v54
    %v75 = vpack.c.b16 %v74, %v73
    %v93 = vunpack.c.l.b16 %v55
    %v94 = vunpack.c.h.b16 %v55
    %v95 = vunpack.c.l.b16 %v56
    %v96 = vunpack.c.h.b16 %v56
    %v97 = vunpack.c.l.b16 %v57
    %v98 = vunpack.c.h.b16 %v57
    %v99 = vunpack.c.l.b16 %v58
    %v100 = vunpack.c.h.b16 %v58
    %v101 = vunpack.c.l.b16 %v59
    %v102 = vunpack.c.h.b16 %v59
    %v103 = vunpack.c.l.b16 %v60
    %v104 = vunpack.c.h.b16 %v60
    %v105 = vunpack.c.l.b16 %v61
    %v106 = vunpack.c.h.b16 %v61
    %v107 = vunpack.c.l.b16 %v62
    %v108 = vunpack.c.h.b16 %v62
    %v109 = vunpack.c.l.b16 %v63
    %v110 = vunpack.c.h.b16 %v63
    %v111 = vunpack.c.l.b16 %v64
    %v112 = vunpack.c.h.b16 %v64
    %v113 = vunpack.c.l.b16 %v65
    %v114 = vunpack.c.h.b16 %v65
    %v115 = vunpack.c.l.b16 %v66
    %v116 = vunpack.c.h.b16 %v66
    %v117 = vunpack.c.l.b16 %v67
    %v118 = vunpack.c.h.b16 %v67
    %v119 = vunpack.c.l.b16 %v68
    %v120 = vunpack.c.h.b16 %v68
    %v121 = vunpack.c.l.b16 %v69
    %v122 = vunpack.c.h.b16 %v69
    %v123 = vunpack.c.l.b16 %v70
    %v124 = vunpack.c.h.b16 %v70
    %v125 = vpack.c.b16 %v95, %v93
    %v126 = vpack.c.b16 %v96, %v94
    %v127 = vpack.c.b16 %v99, %v97
    %v128 = vpack.c.b16 %v100, %v98
    %v129 = vpack.c.b16 %v103, %v101
    %v130 = vpack.c.b16 %v104, %v102
    %v131 = vpack.c.b16 %v107, %v105
    %v132 = vpack.c.b16 %v108, %v106
    %v133 = vpack.c.b16 %v111, %v109
    %v134 = vpack.c.b16 %v112, %v110
    %v135 = vpack.c.b16 %v115, %v113
    %v136 = vpack.c.b16 %v116, %v114
    %v137 = vpack.c.b16 %v119, %v117
    %v138 = vpack.c.b16 %v120, %v118
    %v139 = vpack.c.b16 %v123, %v121
    %v140 = vpack.c.b16 %v124, %v122
    %157 = vmatprep.subr.bf16.mxu0 %v126
    %158 = vmatpush1.bf16.msra.mxu0 %v125
    %159 = vmatprep.subr.bf16.mxu0 %v128
    %160 = vmatpush1.bf16.msra.mxu0 %v127
    %161 = vmatprep.subr.bf16.mxu0 %v130
    %162 = vmatpush1.bf16.msra.mxu0 %v129
    %163 = vmatprep.subr.bf16.mxu0 %v132
    %164 = vmatpush1.bf16.msra.mxu0 %v131
    %165 = vmatprep.subr.bf16.mxu0 %v134
    %166 = vmatpush1.bf16.msra.mxu0 %v133
    %167 = vmatprep.subr.bf16.mxu0 %v136
    %168 = vmatpush1.bf16.msra.mxu0 %v135
    %169 = vmatprep.subr.bf16.mxu0 %v138
    %170 = vmatpush1.bf16.msra.mxu0 %v137
    %171 = vmatprep.subr.bf16.mxu0 %v140
    %172 = vmatpush1.bf16.msra.mxu0 %v139
    %173 = vmatprep.subr.bf16.mxu0 0
    %174 = vmatpush1.bf16.msra.mxu0 0
    %175 = vmatprep.subr.bf16.mxu0 0
    %176 = vmatpush1.bf16.msra.mxu0 0
    %177 = vmatprep.subr.bf16.mxu0 0
    %178 = vmatpush1.bf16.msra.mxu0 0
    %179 = vmatprep.subr.bf16.mxu0 0
    %180 = vmatpush1.bf16.msra.mxu0 0
    %181 = vmatprep.subr.bf16.mxu0 0
    %182 = vmatpush1.bf16.msra.mxu0 0
    %183 = vmatprep.subr.bf16.mxu0 0
    %184 = vmatpush1.bf16.msra.mxu0 0
    %185 = vmatprep.subr.bf16.mxu0 0
    %186 = vmatpush1.bf16.msra.mxu0 0
    %187 = vmatprep.subr.bf16.mxu0 0
    %188 = vmatpush1.bf16.msra.mxu0 0
    %189 = vmatprep.mubr.bf16.mxu0 0
    %190 = vmatmul.mubr.bf16.gmra.mrb[0].mxu0 %v75
    %v191 = vpop.f32.mrb[0].mxu0
    %v192 = vadd.f32 0.0, %v191
    %v193 = vpop.f32.mrb[0].mxu0
    %v194 = vadd.f32 0.0, %v193
    %v195 = vpop.f32.mrb[0].mxu0
    %v196 = vadd.f32 0.0, %v195
    %v197 = vpop.f32.mrb[0].mxu0
    %v198 = vadd.f32 0.0, %v197
    %199 = vdwg.mxu0
    %v200 = vadd.f32 %v49, %v192
    %v201 = vadd.f32 %v50, %v194
    %v202 = vadd.f32 %v51, %v196
    %v203 = vadd.f32 %v52, %v198
    %204 = vst [vmem:[%s3] sm:$0xff] %v200
    %205 = vst [vmem:[%s3 + $0x8] sm:$0xff] %v201
    %206 = vst [vmem:[%s3 + $0x10] sm:$0xff] %v202
    %207 = vst [vmem:[%s3 + $0x18] sm:$0xff] %v203
    // Predicated region
    $region22: #{server_model_forward.1} parent=1 // pred_check
      _
    $region23: #{server_model_forward.1} parent=1 // pred_check_branch
      %209 = sbr.rel (0) target = $region25
    $region24: #{server_model_forward.1} parent=1 // pred_region
      _
    $region25: #{server_model_forward.1} parent=1 // pred_fallthru
      _
    // Predicated region
    $region26: #{server_model_forward.1} parent=1 // pred_check
      _
    $region27: #{server_model_forward.1} parent=1 // pred_check_branch
      %211 = sbr.rel (0) target = $region29
    $region28: #{server_model_forward.1} parent=1 // pred_region
      _
    $region29: #{server_model_forward.1} parent=1 // pred_fallthru
      _
    %212 = vsyncpa [#allocation3], 1

</llo_original>
